<compile_context>
chip_gen: v7x
topology: tpu7x:2x2x1
jax: 0.10.0
libtpu: 0.0.40
codegen_flags: <defaults>
</compile_context>

<pallas_src>
import functools

import jax
import jax.numpy as jnp
from jax.experimental import pallas as pl
from jax.experimental.pallas import tpu as pltpu


def _round_up(x, m):
    return ((x + m - 1) // m) * m


def _loss_partial_kernel(a_ref, b_ref, out_ref, *, kind, n_valid, tile_rows,
                         lane, needs_mask):
    """Per-tile elementwise loss + per-lane partial sums (pure VPU/EUP work)."""
    i = pl.program_id(0)

    a = a_ref[...].astype(jnp.float32)          # (tile_rows, lane)
    b = b_ref[...].astype(jnp.float32)

    if kind == "mse":
        d = a - b
        val = d * d
    elif kind == "bce":
        # Numerically-stable BCE-with-logits (same form PyTorch uses):
        #   max(x, 0) - x*y + log(1 + exp(-|x|))
        x, y = a, b
        val = jnp.maximum(x, 0.0) - x * y + jnp.log(1.0 + jnp.exp(-jnp.abs(x)))
    else:
        raise ValueError(f"unsupported kind: {kind}")

    if needs_mask:
        # Zero out padded tail elements (flat index >= n_valid).
        row = jax.lax.broadcasted_iota(jnp.int32, (tile_rows, lane), 0)
        col = jax.lax.broadcasted_iota(jnp.int32, (tile_rows, lane), 1)
        flat = (i * tile_rows + row) * lane + col      # ok for n < 2**31
        val = jnp.where(flat < n_valid, val, 0.0)

    # Per-lane partial sum for this tile; the cross-lane / cross-tile reduce
    # (tiny: num_tiles x lane f32) happens outside the kernel.
    out_ref[...] = jnp.sum(val, axis=0, keepdims=True)


def _mean_loss(a, b, kind):
    """mean(elementwise_loss(a, b)) over all elements, via a Pallas reduction."""
    assert a.shape == b.shape, (a.shape, b.shape)
    n = a.size

    # Lane-dense layout: flatten to (rows, lane), lane a multiple of 128.
    lane = 512 if n >= 512 * 8 else 128
    rows = pl.cdiv(n, lane)
    # (8,128)-aligned tile, <= 2 MiB per input block.
    tile_rows = min(1024, _round_up(rows, 8))
    num_tiles = pl.cdiv(rows, tile_rows)
    padded_rows = num_tiles * tile_rows
    padded = padded_rows * lane

    a_flat = a.reshape(-1)
    b_flat = b.reshape(-1)
    if padded != n:
        a_flat = jnp.pad(a_flat, (0, padded - n))
        b_flat = jnp.pad(b_flat, (0, padded - n))
    a2 = a_flat.reshape(padded_rows, lane)
    b2 = b_flat.reshape(padded_rows, lane)

    kernel = functools.partial(
        _loss_partial_kernel, kind=kind, n_valid=n, tile_rows=tile_rows,
        lane=lane, needs_mask=(padded != n))

    partials = pl.pallas_call(
        kernel,
        out_shape=jax.ShapeDtypeStruct((num_tiles, lane), jnp.float32),
        grid_spec=pltpu.PrefetchScalarGridSpec(
            num_scalar_prefetch=0,
            grid=(num_tiles,),
            in_specs=[
                pl.BlockSpec((tile_rows, lane), lambda i: (i, 0)),
                pl.BlockSpec((tile_rows, lane), lambda i: (i, 0)),
            ],
            out_specs=pl.BlockSpec((1, lane), lambda i: (i, 0)),
        ),
        compiler_params=pltpu.CompilerParams(
            # Each grid step owns its output block -> fully parallel
            # (lets v7x shard the grid across both TensorCores).
            dimension_semantics=("parallel",),
        ),
    )(a2, b2)

    return jnp.sum(partials) / jnp.float32(n)


def consistency_loss(input_1, input_2, loss_type="mse"):
    """JAX/Pallas equivalent of ConsistencyLoss.forward."""
    if loss_type == "mse":
        return _mean_loss(input_1, input_2, "mse")
    if loss_type == "bce":
        return _mean_loss(input_1, input_2, "bce")
    if loss_type in ("perceptual", "perceptual_color_hm", "perceptual_gray_hm"):
        # TODO(synk): perceptual paths require the external VGG feature
        # extractor (self.vggnet); no self-contained Pallas equivalent.
        raise NotImplementedError(
            "perceptual loss variants need an external VGG network")
    raise ValueError("Incorrect loss_type for consistency loss", loss_type)


# ---------------------------------------------------------------------------
# Pure-JAX references mirroring the PyTorch forward (for validation).
# ---------------------------------------------------------------------------
def _mse_ref(a, b):
    return jnp.mean((a - b) ** 2)


def _bce_with_logits_ref(x, y):
    return jnp.mean(jnp.maximum(x, 0.0) - x * y
                    + jnp.log(1.0 + jnp.exp(-jnp.abs(x))))


if __name__ == "__main__":
    key = jax.random.PRNGKey(0)
    k1, k2, k3 = jax.random.split(key, 3)

    # batch=2, channels=4, spatial=16  (heatmap-like inputs the module expects)
    shape = (2, 4, 16, 16)
    x1 = jax.random.normal(k1, shape, dtype=jnp.float32)
    x2 = jax.random.normal(k2, shape, dtype=jnp.float32)
    targets = jax.random.uniform(k3, shape, dtype=jnp.float32)

    # loss_type='mse'
    got_mse = jax.block_until_ready(consistency_loss(x1, x2, "mse"))
    want_mse = _mse_ref(x1, x2)
    assert jnp.allclose(got_mse, want_mse, rtol=1e-5, atol=1e-6), (got_mse, want_mse)

    # loss_type='bce' (input_1 = logits, input_2 = targets in [0, 1])
    got_bce = jax.block_until_ready(consistency_loss(x1, targets, "bce"))
    want_bce = _bce_with_logits_ref(x1, targets)
    assert jnp.allclose(got_bce, want_bce, rtol=1e-5, atol=1e-6), (got_bce, want_bce)

    # Non-tile-aligned shape to exercise the padding/mask path.
    odd_shape = (3, 5, 7, 11)
    y1 = jax.random.normal(k1, odd_shape, dtype=jnp.float32)
    y2 = jax.random.normal(k2, odd_shape, dtype=jnp.float32)
    got_odd = jax.block_until_ready(consistency_loss(y1, y2, "mse"))
    want_odd = _mse_ref(y1, y2)
    assert jnp.allclose(got_odd, want_odd, rtol=1e-5, atol=1e-6), (got_odd, want_odd)

    print("KERNEL_OK")
</pallas_src>

<mosaic_0001>
module attributes {stable_mosaic.version = 11 : i64} {
  func.func @_loss_partial_kernel(%arg0: i32, %arg1: memref<16x128xf32, #tpu.memory_space<vmem>>, %arg2: memref<16x128xf32, #tpu.memory_space<vmem>>, %arg3: memref<1x128xf32, #tpu.memory_space<vmem>>) attributes {dimension_semantics = [#tpu.dimension_semantics<parallel>], iteration_bounds = array<i64: 1>, scalar_prefetch = 0 : i64, scratch_operands = 0 : i64, tpu.core_type = #tpu.core_type<tc>, window_params = [{transform_indices = @transform_0, window_bounds = array<i64: 16, 128>}, {transform_indices = @transform_1, window_bounds = array<i64: 16, 128>}, {transform_indices = @transform_2, window_bounds = array<i64: 1, 128>}]} {
    %c0 = arith.constant 0 : index
    %c0_0 = arith.constant 0 : index
    %0 = vector.load %arg1[%c0, %c0_0] : memref<16x128xf32, #tpu.memory_space<vmem>>, vector<16x128xf32>
    %c0_1 = arith.constant 0 : index
    %c0_2 = arith.constant 0 : index
    %1 = vector.load %arg2[%c0_1, %c0_2] : memref<16x128xf32, #tpu.memory_space<vmem>>, vector<16x128xf32>
    %2 = arith.subf %0, %1 : vector<16x128xf32>
    %3 = arith.mulf %2, %2 : vector<16x128xf32>
    %cst = arith.constant dense<0.000000e+00> : vector<128xf32>
    %4 = vector.multi_reduction <add>, %3, %cst [0] : vector<16x128xf32> to vector<128xf32>
    %5 = vector.shape_cast %4 : vector<128xf32> to vector<1x128xf32>
    %c0_3 = arith.constant 0 : index
    %c0_4 = arith.constant 0 : index
    %6 = vector.load %arg3[%c0_3, %c0_4] : memref<1x128xf32, #tpu.memory_space<vmem>>, vector<1x128xf32>
    tpu.vector_store %arg3[%c0_3, %c0_4], %5 {strides = array<i32>} : memref<1x128xf32, #tpu.memory_space<vmem>>, vector<1x128xf32>,
    return
  }
  func.func @transform_0(%arg0: i32) -> (i32, i32) {
    %c0_i32 = arith.constant 0 : i32
    %c0_i32_0 = arith.constant 0 : i32
    return %arg0, %c0_i32 : i32, i32
  }
  func.func @transform_1(%arg0: i32) -> (i32, i32) {
    %c0_i32 = arith.constant 0 : i32
    %c0_i32_0 = arith.constant 0 : i32
    return %arg0, %c0_i32 : i32, i32
  }
  func.func @transform_2(%arg0: i32) -> (i32, i32) {
    %c0_i32 = arith.constant 0 : i32
    %c0_i32_0 = arith.constant 0 : i32
    return %arg0, %c0_i32 : i32, i32
  }
}

</mosaic_0001>

<llo_original>
// kernel: tpu_custom_call.1
$region0: #{tpu_custom_call.1}
  #allocation0 [shape = 'u32[]', space=smem, size = 0x4, offset = 0x4, fixed_abs, tag = 'smem constant byte address 0x4 - core index']
  #allocation1 [shape = 'u32[144,128]{1,0:T(1,128)}', space=vmem, size = 0x12000, scoped, tag = 'internal scratch']
  %s0 = inlined_call_operand.hbm [shape: f32[16,128], index: 0, kind: input, shape index: {}]
  %s1 = inlined_call_operand.hbm [shape: f32[16,128], index: 1, kind: input, shape index: {}]
  %s2 = inlined_call_operand.hbm [shape: f32[1,128], index: 2, kind: output, shape index: {}]
  %s3 = sld [smem:[#allocation0]]
  $region26: #{tpu_custom_call.1} parent=0
    _
  %s5 = ssub.s32 1, %s3
  %s6 = scalar_select 0, %s5, %s3
  $region1: #{tpu_custom_call.1} parent=0
    #allocation2 [shape = 'u8[8192]{0}', space=vmem, size = 0x2000, scoped, tag = 'input window, operand 0, single buffered']
    #allocation3 [shape = 's32[1]{0}', space=sflag, size = 0x4, scoped, tag = 'scoped memory for tpu_custom_call.1']
    #allocation4 [shape = 's32[1]{0}', space=sflag, size = 0x4, scoped, tag = 'scoped memory for tpu_custom_call.1']
    #allocation5 [shape = 'u8[8192]{0}', space=vmem, size = 0x2000, scoped, tag = 'input window, operand 1, single buffered']
    #allocation6 [shape = 's32[1]{0}', space=sflag, size = 0x4, scoped, tag = 'scoped memory for tpu_custom_call.1']
    #allocation7 [shape = 'u8[512]{0}', space=vmem, size = 0x400, scoped, tag = 'output window, operand 0, single buffered']
    %7 = vsyncpa [#allocation3], 0
    %8 = vsyncpa [#allocation6], 0
    %9 = vsyncpa [#allocation4], 0
    // Predicated region
    $region2: #{tpu_custom_call.1} parent=1 // pred_check
      _
    $region3: #{tpu_custom_call.1} parent=1 // pred_check_branch
      %11 = sbr.rel (0) target = $region5
    $region4: #{tpu_custom_call.1} parent=1 // pred_region
      %s13 = ssub.s32 256, 256
      %14 = vsyncadd [#allocation3], %s13
      %s15 = sshll.u32 [#allocation2], 4
      %s16 = int_to_ptr.vmem [resolvable:$true] %s15
      %21 = dma.hbm_to_vmem [thread:$0]  %s0, 256, %s16, [#allocation3], 128, 128, 8
    $region5: #{tpu_custom_call.1} parent=1 // pred_fallthru
      _
    // Predicated region
    $region6: #{tpu_custom_call.1} parent=1 // pred_check
      _
    $region7: #{tpu_custom_call.1} parent=1 // pred_check_branch
      %23 = sbr.rel (0) target = $region9
    $region8: #{tpu_custom_call.1} parent=1 // pred_region
      %s25 = ssub.s32 256, 256
      %26 = vsyncadd [#allocation6], %s25
      %s27 = sshll.u32 [#allocation5], 4
      %s28 = int_to_ptr.vmem [resolvable:$true] %s27
      %33 = dma.hbm_to_vmem [thread:$0]  %s1, 256, %s28, [#allocation6], 128, 128, 8
    $region9: #{tpu_custom_call.1} parent=1 // pred_fallthru
      _
    // Predicated region
    $region10: #{tpu_custom_call.1} parent=1 // pred_check
      _
    $region11: #{tpu_custom_call.1} parent=1 // pred_check_branch
      %35 = sbr.rel (0) target = $region13
    $region12: #{tpu_custom_call.1} parent=1 // pred_region
      %36 = dma.done [#allocation3], 256
    $region13: #{tpu_custom_call.1} parent=1 // pred_fallthru
      _
    // Predicated region
    $region14: #{tpu_custom_call.1} parent=1 // pred_check
      _
    $region15: #{tpu_custom_call.1} parent=1 // pred_check_branch
      %38 = sbr.rel (0) target = $region17
    $region16: #{tpu_custom_call.1} parent=1 // pred_region
      %39 = dma.done [#allocation6], 256
    $region17: #{tpu_custom_call.1} parent=1 // pred_fallthru
      _
    %v40 = vld [vmem:[#allocation2] sm:$0xff]
    %v41 = vld [vmem:[#allocation2 + $0x8] sm:$0xff]
    %v42 = vld [vmem:[#allocation5] sm:$0xff]
    %v43 = vld [vmem:[#allocation5 + $0x8] sm:$0xff]
    %v44 = vsub.f32 %v40, %v42
    %v45 = vsub.f32 %v41, %v43
    %v46 = vmul.f32 %v44, %v44
    %v47 = vmul.f32 %v45, %v45
    %v48 = vadd.f32 %v46, %v47
    %v49 = vrot.slane %v48, 4
    %v50 = vadd.f32 %v48, %v49
    %v51 = vrot.slane %v50, 2
    %v52 = vadd.f32 %v50, %v51
    %v53 = vrot.slane %v52, 1
    %v54 = vadd.f32 %v52, %v53
    %55 = vst [vmem:[#allocation7] sm:$0x1] %v54
    // Predicated region
    $region18: #{tpu_custom_call.1} parent=1 // pred_check
      _
    $region19: #{tpu_custom_call.1} parent=1 // pred_check_branch
      %57 = sbr.rel (0) target = $region21
    $region20: #{tpu_custom_call.1} parent=1 // pred_region
      %s59 = ssub.s32 16, 16
      %60 = vsyncadd [#allocation4], %s59
      %s62 = sshll.u32 [#allocation7], 4
      %s63 = int_to_ptr.vmem [resolvable:$true] %s62
      %65 = dma.vmem_to_hbm [thread:$0]  %s63, 16, %s2, [#allocation4]
    $region21: #{tpu_custom_call.1} parent=1 // pred_fallthru
      _
    // Predicated region
    $region22: #{tpu_custom_call.1} parent=1 // pred_check
      _
    $region23: #{tpu_custom_call.1} parent=1 // pred_check_branch
      %67 = sbr.rel (0) target = $region25
    $region24: #{tpu_custom_call.1} parent=1 // pred_region
      %68 = dma.done [#allocation4], 16
    $region25: #{tpu_custom_call.1} parent=1 // pred_fallthru
      _
    %69 = vsyncpa [#allocation3], 1
    %70 = vsyncpa [#allocation6], 1
    %71 = vsyncpa [#allocation4], 1

</llo_original>
